<compile_context>
chip_gen: v6e
topology: v6e:2x2x1
jax: 0.10.0
libtpu: 0.0.40
codegen_flags: <defaults>
</compile_context>

<pallas_src>
import functools

import jax
import jax.numpy as jnp
from jax.experimental import pallas as pl
from jax.experimental.pallas import tpu as pltpu


def conv_bn_silu_kernel(x_ref, w_ref, b_ref, o_ref, *, H, W, K,
                        compute_dtype, apply_act):
    """One batch element: x (1, C1, H*W) -> o (1, C2, H*W), lane-dense."""
    HW = H * W
    pad = K // 2
    x = x_ref[0, :, :].astype(compute_dtype)            # (C1, HW)

    if K == 1:
        xcol = x                                          # (C1, HW)
    else:
        # Static per-tap boundary masks (SAME zero padding).
        pix = jax.lax.broadcasted_iota(jnp.int32, (1, HW), 1)
        yy = pix // W
        xx = pix % W
        zero = jnp.zeros((), compute_dtype)
        slabs = []
        for dy in range(K):
            for dx in range(K):
                oy = dy - pad
                ox = dx - pad
                off = oy * W + ox                         # flat pixel offset
                if off == 0:
                    shifted = x
                else:
                    # shifted[p] = x[p + off]  (wrap-around gets masked below)
                    shifted = pltpu.roll(x, shift=(-off) % HW, axis=1)
                valid = ((yy + oy >= 0) & (yy + oy < H) &
                         (xx + ox >= 0) & (xx + ox < W))  # (1, HW)
                slabs.append(jnp.where(valid, shifted, zero))
        xcol = jnp.concatenate(slabs, axis=0)             # (K*K*C1, HW)

    # Single im2col matmul on the MXU, f32 accumulation.
    acc = jnp.dot(w_ref[...].astype(compute_dtype), xcol,
                  preferred_element_type=jnp.float32)     # (C2, HW)
    acc = acc + b_ref[...].astype(jnp.float32)            # (C2, 1) broadcast
    if apply_act:
        acc = acc * jax.nn.sigmoid(acc)                   # SiLU
    o_ref[0, :, :] = acc.astype(o_ref.dtype)


def conv_forward(x_nchw, w_flat, b_col, *, K, apply_act=True,
                 compute_dtype=jnp.float32):
    """Conv(c1, c2, k=K, s=1) + BN(eval, folded) + SiLU, NCHW in / NCHW out."""
    N, C1, H, W = x_nchw.shape
    C2 = w_flat.shape[0]
    HW = H * W
    assert w_flat.shape == (C2, K * K * C1)
    assert b_col.shape == (C2, 1)

    x3 = x_nchw.reshape(N, C1, HW)                        # free reshape, lane-dense

    cost = pl.CostEstimate(
        flops=2 * N * HW * C2 * (K * K * C1),
        transcendentals=N * HW * C2 if apply_act else 0,
        bytes_accessed=4 * (x3.size + w_flat.size + b_col.size + N * C2 * HW),
    )

    out = pl.pallas_call(
        functools.partial(conv_bn_silu_kernel, H=H, W=W, K=K,
                          compute_dtype=compute_dtype, apply_act=apply_act),
        out_shape=jax.ShapeDtypeStruct((N, C2, HW), x_nchw.dtype),
        grid_spec=pltpu.PrefetchScalarGridSpec(
            num_scalar_prefetch=0,
            grid=(N,),
            in_specs=[
                pl.BlockSpec((1, C1, HW), lambda n: (n, 0, 0)),
                pl.BlockSpec(w_flat.shape, lambda n: (0, 0)),   # resident weights
                pl.BlockSpec(b_col.shape, lambda n: (0, 0)),    # resident bias
            ],
            out_specs=pl.BlockSpec((1, C2, HW), lambda n: (n, 0, 0)),
        ),
        compiler_params=pltpu.CompilerParams(
            dimension_semantics=("parallel",)),
        cost_estimate=cost,
    )(x3, w_flat, b_col)
    return out.reshape(N, C2, H, W)


def fold_conv_bn_weights(key, c1, c2, k, eps=1e-5):
    """Synthetic Conv2d(bias=False) + BatchNorm2d(eval) fold.

    Returns (w_oihw_folded, w_flat_lane_dense, bias_column):
      w_flat[o, (dy*K+dx)*c1 + c] = w_oihw[o, c, dy, dx]  (matches im2col order).
    """
    kw, kg, kb, km, kv = jax.random.split(key, 5)
    w = jax.random.normal(kw, (c2, c1, k, k), jnp.float32) / (c1 * k * k) ** 0.5
    gamma = 1.0 + 0.1 * jax.random.normal(kg, (c2,), jnp.float32)
    beta = 0.1 * jax.random.normal(kb, (c2,), jnp.float32)
    mean = 0.1 * jax.random.normal(km, (c2,), jnp.float32)
    var = jax.random.uniform(kv, (c2,), jnp.float32, minval=0.5, maxval=1.5)
    scale = gamma / jnp.sqrt(var + eps)
    w_f = w * scale[:, None, None, None]                  # fold BN scale (OIHW)
    b_f = beta - mean * scale                             # fold BN shift
    w_flat = jnp.transpose(w_f, (0, 2, 3, 1)).reshape(c2, k * k * c1)
    return w_f, w_flat, b_f.reshape(c2, 1)


def ref_forward(x_nchw, w_oihw, b_col, *, apply_act=True):
    """Pure-JAX reference (lax conv, SAME padding, stride 1)."""
    out = jax.lax.conv_general_dilated(
        x_nchw, w_oihw, window_strides=(1, 1), padding='SAME',
        dimension_numbers=('NCHW', 'OIHW', 'NCHW'))
    out = out + b_col.reshape(1, -1, 1, 1)
    if apply_act:
        out = out * jax.nn.sigmoid(out)
    return out


if __name__ == "__main__":
    N, C1, C2, H, W = 2, 4, 4, 16, 16

    key = jax.random.PRNGKey(0)
    kx, kw1, kw3 = jax.random.split(key, 3)
    # PyTorch module input layout is NCHW; the kernel consumes it directly
    # (channels-first is already the lane-dense layout after flattening H*W).
    x = jax.random.normal(kx, (N, C1, H, W), jnp.float32)

    # Exercise both the default 1x1 Conv and the 3x3 (autopad=1) Conv path.
    for k, wkey in ((1, kw1), (3, kw3)):
        w_oihw, w_flat, b_col = fold_conv_bn_weights(wkey, C1, C2, k)
        out = conv_forward(x, w_flat, b_col, K=k)
        out = jax.block_until_ready(out)
        ref = ref_forward(x, w_oihw, b_col)
        assert out.shape == (N, C2, H, W), out.shape
        max_err = float(jnp.max(jnp.abs(out - ref)))
        assert jnp.allclose(out, ref, atol=2e-3, rtol=2e-3), (k, max_err)

    print("KERNEL_OK")
</pallas_src>

<mosaic_0001>
module attributes {stable_mosaic.version = 11 : i64} {
  func.func @conv_bn_silu_kernel(%arg0: i32, %arg1: memref<1x4x256xf32, #tpu.memory_space<vmem>>, %arg2: memref<4x4xf32, #tpu.memory_space<vmem>>, %arg3: memref<4x1xf32, #tpu.memory_space<vmem>>, %arg4: memref<1x4x256xf32, #tpu.memory_space<vmem>>) attributes {dimension_semantics = [#tpu.dimension_semantics<parallel>], iteration_bounds = array<i64: 2>, scalar_prefetch = 0 : i64, scratch_operands = 0 : i64, tpu.core_type = #tpu.core_type<tc>, window_params = [{transform_indices = @transform_0, window_bounds = array<i64: 1, 4, 256>}, {pipeline_mode = #tpu.pipeline_mode<synchronous>, transform_indices = @transform_1, window_bounds = array<i64: 4, 4>}, {pipeline_mode = #tpu.pipeline_mode<synchronous>, transform_indices = @transform_2, window_bounds = array<i64: 4, 1>}, {transform_indices = @transform_3, window_bounds = array<i64: 1, 4, 256>}]} {
    %c0 = arith.constant 0 : index
    %c0_0 = arith.constant 0 : index
    %c0_1 = arith.constant 0 : index
    %0 = vector.load %arg1[%c0, %c0_0, %c0_1] : memref<1x4x256xf32, #tpu.memory_space<vmem>>, vector<1x4x256xf32>
    %1 = vector.shape_cast %0 : vector<1x4x256xf32> to vector<4x256xf32>
    %c0_2 = arith.constant 0 : index
    %c0_3 = arith.constant 0 : index
    %2 = vector.load %arg2[%c0_2, %c0_3] : memref<4x4xf32, #tpu.memory_space<vmem>>, vector<4x4xf32>
    %cst = arith.constant dense<0.000000e+00> : vector<4x256xf32>
    %3 = tpu.matmul %2, %1, %cst {dimension_numbers = #tpu.dot_dimension_numbers<[1], [0], [0], [1], [0, 0, 1, 1], [], []>} : vector<4x4xf32>, vector<4x256xf32>, vector<4x256xf32> -> vector<4x256xf32>
    %c0_4 = arith.constant 0 : index
    %c0_5 = arith.constant 0 : index
    %4 = vector.load %arg3[%c0_4, %c0_5] : memref<4x1xf32, #tpu.memory_space<vmem>>, vector<4x1xf32>
    %5 = vector.broadcast %4 : vector<4x1xf32> to vector<4x256xf32>
    %6 = arith.addf %3, %5 : vector<4x256xf32>
    %7 = arith.negf %6 : vector<4x256xf32>
    %8 = math.exp %7 : vector<4x256xf32>
    %cst_6 = arith.constant 1.000000e+00 : f32
    %9 = vector.broadcast %cst_6 : f32 to vector<4x256xf32>
    %10 = arith.addf %9, %8 : vector<4x256xf32>
    %11 = arith.divf %9, %10 : vector<4x256xf32>
    %12 = arith.mulf %6, %11 : vector<4x256xf32>
    %c0_7 = arith.constant 0 : index
    %c0_8 = arith.constant 0 : index
    %c0_9 = arith.constant 0 : index
    %13 = vector.load %arg4[%c0_7, %c0_8, %c0_9] : memref<1x4x256xf32, #tpu.memory_space<vmem>>, vector<1x4x256xf32>
    %14 = vector.shape_cast %13 : vector<1x4x256xf32> to vector<4x256xf32>
    %15 = vector.shape_cast %12 : vector<4x256xf32> to vector<1x4x256xf32>
    tpu.vector_store %arg4[%c0_7, %c0_8, %c0_9], %15 {strides = array<i32>} : memref<1x4x256xf32, #tpu.memory_space<vmem>>, vector<1x4x256xf32>,
    return
  }
  func.func @transform_0(%arg0: i32) -> (i32, i32, i32) {
    %c0_i32 = arith.constant 0 : i32
    %c0_i32_0 = arith.constant 0 : i32
    %c0_i32_1 = arith.constant 0 : i32
    return %arg0, %c0_i32, %c0_i32_0 : i32, i32, i32
  }
  func.func @transform_1(%arg0: i32) -> (i32, i32) {
    %c0_i32 = arith.constant 0 : i32
    %c0_i32_0 = arith.constant 0 : i32
    %c0_i32_1 = arith.constant 0 : i32
    return %c0_i32, %c0_i32_0 : i32, i32
  }
  func.func @transform_2(%arg0: i32) -> (i32, i32) {
    %c0_i32 = arith.constant 0 : i32
    %c0_i32_0 = arith.constant 0 : i32
    %c0_i32_1 = arith.constant 0 : i32
    return %c0_i32, %c0_i32_0 : i32, i32
  }
  func.func @transform_3(%arg0: i32) -> (i32, i32, i32) {
    %c0_i32 = arith.constant 0 : i32
    %c0_i32_0 = arith.constant 0 : i32
    %c0_i32_1 = arith.constant 0 : i32
    return %arg0, %c0_i32, %c0_i32_0 : i32, i32, i32
  }
}

</mosaic_0001>

<llo_original>
// kernel: tpu_custom_call.1
$region0: #{tpu_custom_call.1}
  #allocation0 [shape = 'u32[]', space=smem, size = 0x4, offset = 0x4, fixed_abs, tag = 'smem constant byte address 0x4 - core index']
  #allocation1 [shape = 'u32[144,128]{1,0:T(1,128)}', space=vmem, size = 0x12000, scoped, tag = 'internal scratch']
  %s0 = inlined_call_operand.hbm [shape: f32[2,4,256], index: 0, kind: input, shape index: {}]
  %s1 = inlined_call_operand.vmem [shape: f32[4,4], index: 1, kind: input, shape index: {}]
  %s2 = inlined_call_operand.vmem [shape: f32[4,1], index: 2, kind: input, shape index: {}]
  %s3 = inlined_call_operand.hbm [shape: f32[2,4,256], index: 3, kind: output, shape index: {}]
  %s4 = sld [smem:[#allocation0]]
  $region49: #{tpu_custom_call.1} parent=0
    _
  %s6 = ssub.s32 1, %s4
  %s7 = scalar_select 0, %s6, %s4
  $region1: #{tpu_custom_call.1} parent=0
    #allocation2 [shape = 'u8[8192]{0}', space=vmem, size = 0x2000, scoped, tag = 'input window, operand 0']
    #allocation3 [shape = 's32[2]{0}', space=sflag, size = 0x8, scoped, tag = 'scoped memory for tpu_custom_call.1']
    #allocation4 [shape = 's32[2]{0}', space=sflag, size = 0x8, scoped, tag = 'scoped memory for tpu_custom_call.1']
    #allocation5 [shape = 'u8[8192]{0}', space=vmem, size = 0x2000, scoped, tag = 'output window, operand 0']
    %8 = vsyncpa [#allocation3], 0
    %s9 = scalar_lea.sflag [#allocation3], 1
    %10 = vsyncpa %s9, 0
    %11 = vsyncpa [#allocation4], 0
    %s12 = scalar_lea.sflag [#allocation4], 1
    %13 = vsyncpa %s12, 0
    loop: start=0, step=1, limit=4
    $region2: #{tpu_custom_call.1} parent=1 // loop_pre_header
      _
    $region3: #{tpu_custom_call.1} parent=1 // loop_header
      %s15 = sphi 0, %s19
      %p16 = scmp.ge.s32.totalorder %s15, 4
      %s25 = sphi 0, %s27
      %s28 = sphi 0, %s25
      %s29 = sphi 0, %s28
      %s45 = sphi 0, %s29
      %s49 = sphi 0, %s49
      %s51 = sphi 0, %s49
      %s52 = sphi 0, %s51
      %s66 = sphi 0, %s52
      %s70 = sphi 0, %s70
      %s72 = sphi 0, %s70
      %s73 = sphi 0, %s72
      %s87 = sphi 0, %s73
      %s93 = sphi 0, %s95
      %s96 = sphi 0, %s93
      %s97 = sphi 0, %s96
      %s113 = sphi 0, %s97
    $region4: #{tpu_custom_call.1} parent=1 // loop_header_branch
      %18 = sbr.rel (%p16) target = $region8
    $region5: #{tpu_custom_call.1} parent=1 // loop_body
      %s20 = ssub.s32 %s15, 1
      %s21 = ssub.s32 %s15, 2
      %s22 = sadd.s32 %s15, 1
      %s23 = ssub.s32 %s15, %s22
      %p24 = scmp.eq.s32.totalorder %s23, 0
      %s26 = sadd.s32 %s25, 1
      %s27 = scalar_select %p24, %s25, %s26
      %p30 = pneg %p24
      %p31 = scmp.eq.s32.totalorder %s15, 1
      %p32 = por %p30, %p31
      %p33 = scmp.ne.s32.totalorder %s25, %s28
      %p34 = scmp.eq.s32.totalorder %s15, 0
      %p35 = por %p33, %p34
      %p36 = scmp.ne.s32.totalorder %s25, %s28
      %p37 = scmp.eq.s32.totalorder %s20, 1
      %p38 = por %p36, %p37
      %p39 = scmp.ne.s32.totalorder %s28, %s29
      %p40 = scmp.eq.s32.totalorder %s20, 0
      %p41 = por %p39, %p40
      %p42 = scmp.ne.s32.totalorder %s28, %s29
      %p43 = scmp.eq.s32.totalorder %s21, 1
      %p44 = por %p42, %p43
      %p46 = scmp.ne.s32.totalorder %s29, %s45
      %p47 = scmp.eq.s32.totalorder %s21, 0
      %p48 = por %p46, %p47
      %s50 = sadd.s32 %s49, 1
      %p53 = scmp.eq.s32.totalorder %s15, 1
      %p54 = scmp.ne.s32.totalorder %s49, %s51
      %p55 = scmp.eq.s32.totalorder %s15, 0
      %p56 = por %p54, %p55
      %p57 = scmp.ne.s32.totalorder %s49, %s51
      %p58 = scmp.eq.s32.totalorder %s20, 1
      %p59 = por %p57, %p58
      %p60 = scmp.ne.s32.totalorder %s51, %s52
      %p61 = scmp.eq.s32.totalorder %s20, 0
      %p62 = por %p60, %p61
      %p63 = scmp.ne.s32.totalorder %s51, %s52
      %p64 = scmp.eq.s32.totalorder %s21, 1
      %p65 = por %p63, %p64
      %p67 = scmp.ne.s32.totalorder %s52, %s66
      %p68 = scmp.eq.s32.totalorder %s21, 0
      %p69 = por %p67, %p68
      %s71 = sadd.s32 %s70, 1
      %p74 = scmp.eq.s32.totalorder %s15, 1
      %p75 = scmp.ne.s32.totalorder %s70, %s72
      %p76 = scmp.eq.s32.totalorder %s15, 0
      %p77 = por %p75, %p76
      %p78 = scmp.ne.s32.totalorder %s70, %s72
      %p79 = scmp.eq.s32.totalorder %s20, 1
      %p80 = por %p78, %p79
      %p81 = scmp.ne.s32.totalorder %s72, %s73
      %p82 = scmp.eq.s32.totalorder %s20, 0
      %p83 = por %p81, %p82
      %p84 = scmp.ne.s32.totalorder %s72, %s73
      %p85 = scmp.eq.s32.totalorder %s21, 1
      %p86 = por %p84, %p85
      %p88 = scmp.ne.s32.totalorder %s73, %s87
      %p89 = scmp.eq.s32.totalorder %s21, 0
      %p90 = por %p88, %p89
      %s91 = ssub.s32 %s15, %s22
      %p92 = scmp.eq.s32.totalorder %s91, 0
      %s94 = sadd.s32 %s93, 1
      %s95 = scalar_select %p92, %s93, %s94
      %p98 = pneg %p92
      %p99 = scmp.eq.s32.totalorder %s15, 1
      %p100 = por %p98, %p99
      %p101 = scmp.ne.s32.totalorder %s93, %s96
      %p102 = scmp.eq.s32.totalorder %s15, 0
      %p103 = por %p101, %p102
      %p104 = scmp.ne.s32.totalorder %s93, %s96
      %p105 = scmp.eq.s32.totalorder %s20, 1
      %p106 = por %p104, %p105
      %p107 = scmp.ne.s32.totalorder %s96, %s97
      %p108 = scmp.eq.s32.totalorder %s20, 0
      %p109 = por %p107, %p108
      %p110 = scmp.ne.s32.totalorder %s96, %s97
      %p111 = scmp.eq.s32.totalorder %s21, 1
      %p112 = por %p110, %p111
      %p114 = scmp.ne.s32.totalorder %s97, %s113
      %p115 = scmp.eq.s32.totalorder %s21, 0
      %p116 = por %p114, %p115
      %p117 = scmp.le.s32.totalorder 1, %s15
      %p118 = scmp.lt.s32.totalorder %s15, 3
      %p119 = pnand %p117, %p118
      %p120 = pneg %p119
      // Predicated region
      $region9: #{tpu_custom_call.1} parent=5 // pred_check
        _
      $region10: #{tpu_custom_call.1} parent=5 // pred_check_branch
        %122 = sbr.rel (%p119) target = $region12
      $region11: #{tpu_custom_call.1} parent=5 // pred_region
        %s123 = ssub.s32 %s15, 1
        // Predicated region
        $region13: #{tpu_custom_call.1} parent=11 // pred_check
          %p124 = pneg %p62
        $region14: #{tpu_custom_call.1} parent=11 // pred_check_branch
          %126 = sbr.rel (%p124) target = $region16
        $region15: #{tpu_custom_call.1} parent=11 // pred_region
          _
        $region16: #{tpu_custom_call.1} parent=11 // pred_fallthru
          _
        // Predicated region
        $region17: #{tpu_custom_call.1} parent=11 // pred_check
          %p127 = pneg %p83
        $region18: #{tpu_custom_call.1} parent=11 // pred_check_branch
          %129 = sbr.rel (%p127) target = $region20
        $region19: #{tpu_custom_call.1} parent=11 // pred_region
          _
        $region20: #{tpu_custom_call.1} parent=11 // pred_fallthru
          _
      $region12: #{tpu_custom_call.1} parent=5 // pred_fallthru
        _
      %p130 = scmp.lt.s32.totalorder %s15, 2
      // Predicated region
      $region21: #{tpu_custom_call.1} parent=5 // pred_check
        %p131 = pneg %p130
      $region22: #{tpu_custom_call.1} parent=5 // pred_check_branch
        %133 = sbr.rel (%p131) target = $region24
      $region23: #{tpu_custom_call.1} parent=5 // pred_region
        // Predicated region
        $region25: #{tpu_custom_call.1} parent=23 // pred_check
          %p134 = pneg %p35
        $region26: #{tpu_custom_call.1} parent=23 // pred_check_branch
          %136 = sbr.rel (%p134) target = $region28
        $region27: #{tpu_custom_call.1} parent=23 // pred_region
          %s137 = sand.u32 %s25, 1
          %s138 = scalar_lea.sflag [#allocation3], %s137
          %s139 = sand.u32 %s25, 1
          %s140 = smul.addr %s139, 8
          %s141 = scalar_lea.vmem [#allocation2], %s140
          %s143 = ssub.s32 128, 128
          %144 = vsyncadd %s138, %s143
          %s145 = smul.addr %s15, 2
          %s146 = smul.addr %s145, 64
          %s147 = scalar_lea.hbm %s0, %s146
          %s149 = sshll.u32 %s141, 4
          %s150 = int_to_ptr.vmem [resolvable:$true] %s149
          %152 = dma.hbm_to_vmem [thread:$0]  %s147, 128, %s150, %s138
        $region28: #{tpu_custom_call.1} parent=23 // pred_fallthru
          _
      $region24: #{tpu_custom_call.1} parent=5 // pred_fallthru
        _
      %p153 = scmp.le.s32.totalorder 1, %s15
      %p154 = scmp.lt.s32.totalorder %s15, 3
      %p155 = pnand %p153, %p154
      %p156 = pneg %p155
      // Predicated region
      $region29: #{tpu_custom_call.1} parent=5 // pred_check
        _
      $region30: #{tpu_custom_call.1} parent=5 // pred_check_branch
        %158 = sbr.rel (%p155) target = $region32
      $region31: #{tpu_custom_call.1} parent=5 // pred_region
        %s159 = ssub.s32 %s15, 1
        %s160 = sand.u32 %s28, 1
        %s161 = scalar_lea.sflag [#allocation3], %s160
        %s162 = sand.u32 %s28, 1
        %s163 = smul.addr %s162, 8
        %s164 = scalar_lea.vmem [#allocation2], %s163
        // Predicated region
        $region33: #{tpu_custom_call.1} parent=31 // pred_check
          %p165 = pneg %p41
        $region34: #{tpu_custom_call.1} parent=31 // pred_check_branch
          %167 = sbr.rel (%p165) target = $region36
        $region35: #{tpu_custom_call.1} parent=31 // pred_region
          %168 = dma.done %s161, 128
        $region36: #{tpu_custom_call.1} parent=31 // pred_fallthru
          _
        %s169 = sand.u32 %s28, 1
        %s170 = scalar_lea.sflag [#allocation3], %s169
        %s171 = sand.u32 %s28, 1
        %s172 = smul.addr %s171, 8
        %s173 = scalar_lea.vmem [#allocation2], %s172
        %p174 = pneg %p41
        %p175 = pneg %p38
        %p176 = pneg %p62
        %p177 = pneg %p59
        %p178 = pneg %p83
        %p179 = pneg %p80
        %p180 = pneg %p109
        %p181 = pneg %p106
        %s182 = sand.u32 %s96, 1
        %s183 = scalar_lea.sflag [#allocation4], %s182
        %s184 = sand.u32 %s96, 1
        %s185 = smul.addr %s184, 8
        %s186 = scalar_lea.vmem [#allocation5], %s185
        %v187 = vld [vmem:[%s164] sm:$0xff]
        %v188 = vld [vmem:[%s1] sm:$0xf]
        %v189 = vld [vmem:[%s2] sm:$0xf]
        %191 = vset.pattern.permute.xlu0 0
        %192 = vperm.xlu0 %191, %v189
        %v193 = vpop.permute.xlu0 %192
        %v196 = vcombine.high %v187, %v187
        %vm197 = vcmask 31744
        %v199 = vsel %vm197, %v188, 0
        %vm201 = vcmask 1043456
        %v202 = vsel %vm201, %v187, 0
        %v204 = vsel %vm201, %v196, 0
        %206 = vmatprep.subr.mxu0 0.0
        %207 = vmatpush1.msra.mxu0 0.0
        %208 = vmatprep.subr.mxu0 0.0
        %209 = vmatpush1.msra.mxu0 0.0
        %210 = vmatprep.subr.mxu0 0.0
        %211 = vmatpush1.msra.mxu0 0.0
        %212 = vmatprep.subr.mxu0 0.0
        %213 = vmatpush1.msra.mxu0 0.0
        %214 = vmatprep.subr.mxu0 0.0
        %215 = vmatpush1.msra.mxu0 0.0
        %216 = vmatprep.subr.mxu0 0.0
        %217 = vmatpush1.msra.mxu0 0.0
        %218 = vmatprep.subr.mxu0 0.0
        %219 = vmatpush1.msra.mxu0 0.0
        %220 = vmatprep.subr.mxu0 0.0
        %221 = vmatpush1.msra.mxu0 0.0
        %222 = vmatprep.subr.mxu0 0.0
        %223 = vmatpush1.msra.mxu0 0.0
        %224 = vmatprep.subr.mxu0 0.0
        %225 = vmatpush1.msra.mxu0 0.0
        %226 = vmatprep.subr.mxu0 0.0
        %227 = vmatpush1.msra.mxu0 0.0
        %228 = vmatprep.subr.mxu0 0.0
        %229 = vmatpush1.msra.mxu0 0.0
        %230 = vmatprep.subr.mxu0 0.0
        %231 = vmatpush1.msra.mxu0 0.0
        %232 = vmatprep.subr.mxu0 0.0
        %233 = vmatpush1.msra.mxu0 0.0
        %234 = vmatprep.subr.mxu0 0.0
        %235 = vmatpush1.msra.mxu0 0.0
        %236 = vmatprep.subr.mxu0 %v204
        %237 = vmatpush1.msra.mxu0 %v202
        %238 = vmatprep.subr.mxu0 0.0
        %239 = vmatpush2.msra.mxu0 0.0
        %240 = vmatprep.subr.mxu0 0.0
        %241 = vmatpush2.msra.mxu0 0.0
        %242 = vmatprep.subr.mxu0 0.0
        %243 = vmatpush2.msra.mxu0 0.0
        %244 = vmatprep.subr.mxu0 0.0
        %245 = vmatpush2.msra.mxu0 0.0
        %246 = vmatprep.subr.mxu0 0.0
        %247 = vmatpush2.msra.mxu0 0.0
        %248 = vmatprep.subr.mxu0 0.0
        %249 = vmatpush2.msra.mxu0 0.0
        %250 = vmatprep.subr.mxu0 0.0
        %251 = vmatpush2.msra.mxu0 0.0
        %252 = vmatprep.subr.mxu0 0.0
        %253 = vmatpush2.msra.mxu0 0.0
        %254 = vmatprep.subr.mxu0 0.0
        %255 = vmatpush2.msra.mxu0 0.0
        %256 = vmatprep.subr.mxu0 0.0
        %257 = vmatpush2.msra.mxu0 0.0
        %258 = vmatprep.subr.mxu0 0.0
        %259 = vmatpush2.msra.mxu0 0.0
        %260 = vmatprep.subr.mxu0 0.0
        %261 = vmatpush2.msra.mxu0 0.0
        %262 = vmatprep.subr.mxu0 0.0
        %263 = vmatpush2.msra.mxu0 0.0
        %264 = vmatprep.subr.mxu0 0.0
        %265 = vmatpush2.msra.mxu0 0.0
        %266 = vmatprep.subr.mxu0 0.0
        %267 = vmatpush2.msra.mxu0 0.0
        %268 = vmatprep.subr.mxu0 0.0
        %269 = vmatpush2.msra.mxu0 0.0
        %270 = vmatprep.mubr.f32.mxu0 0.0
        %271 = vmatmul.mubr.f32.gmra.mxu0 %v199
        %v272 = vpop.f32.mrf.mxu0
        %v273 = vadd.f32 %v193, %v272
        %v274 = vpop.f32.mrf.mxu0
        %v275 = vadd.f32 %v193, %v274
        %276 = vdwg.mxu0
        %v277 = vxor.u32 %v273, 2147483648
        %v278 = vxor.u32 %v275, 2147483648
        %v279 = vmul.f32 %v277, 1.442695
        %v280 = vpow.pop %v279
        %v281 = vmul.f32 %v278, 1.442695
        %v282 = vpow.pop %v281
        %v283 = vadd.f32 %v280, 1.0
        %v284 = vadd.f32 %v282, 1.0
        %v285 = vrcp.pop %v283
        %v286 = vmul.f32 1.0, %v285
        %v287 = vrcp.pop %v284
        %v288 = vmul.f32 1.0, %v287
        %v289 = vmul.f32 %v273, %v286
        %v290 = vmul.f32 %v275, %v288
        %v293 = vcombine.low %v289, %v290
        %295 = vst [vmem:[%s186] sm:$0xff] %v293
        %s296 = sand.u32 %s96, 1
        %s297 = scalar_lea.sflag [#allocation4], %s296
        %s298 = sand.u32 %s96, 1
        %s299 = smul.addr %s298, 8
        %s300 = scalar_lea.vmem [#allocation5], %s299
        // Predicated region
        $region37: #{tpu_custom_call.1} parent=31 // pred_check
          %p301 = pneg %p106
        $region38: #{tpu_custom_call.1} parent=31 // pred_check_branch
          %303 = sbr.rel (%p301) target = $region40
        $region39: #{tpu_custom_call.1} parent=31 // pred_region
          %s305 = ssub.s32 128, 128
          %306 = vsyncadd %s297, %s305
          %s307 = smul.addr %s20, 2
          %s308 = smul.addr %s307, 64
          %s309 = scalar_lea.hbm %s3, %s308
          %s311 = sshll.u32 %s300, 4
          %s312 = int_to_ptr.vmem [resolvable:$true] %s311
          %314 = dma.vmem_to_hbm [thread:$0]  %s312, 128, %s309, %s297
        $region40: #{tpu_custom_call.1} parent=31 // pred_fallthru
          _
      $region32: #{tpu_custom_call.1} parent=5 // pred_fallthru
        _
      %p315 = scmp.le.s32.totalorder 2, %s15
      // Predicated region
      $region41: #{tpu_custom_call.1} parent=5 // pred_check
        %p316 = pneg %p315
      $region42: #{tpu_custom_call.1} parent=5 // pred_check_branch
        %318 = sbr.rel (%p316) target = $region44
      $region43: #{tpu_custom_call.1} parent=5 // pred_region
        %s319 = ssub.s32 %s15, 2
        // Predicated region
        $region45: #{tpu_custom_call.1} parent=43 // pred_check
          %p320 = pneg %p112
        $region46: #{tpu_custom_call.1} parent=43 // pred_check_branch
          %322 = sbr.rel (%p320) target = $region48
        $region47: #{tpu_custom_call.1} parent=43 // pred_region
          %s323 = sand.u32 %s97, 1
          %s324 = scalar_lea.sflag [#allocation4], %s323
          %s325 = sand.u32 %s97, 1
          %s326 = smul.addr %s325, 8
          %s327 = scalar_lea.vmem [#allocation5], %s326
          %328 = dma.done %s324, 128
        $region48: #{tpu_custom_call.1} parent=43 // pred_fallthru
          _
      $region44: #{tpu_custom_call.1} parent=5 // pred_fallthru
        _
    $region6: #{tpu_custom_call.1} parent=1 // loop_footer
      %s19 = sadd.s32 1, %s15
    $region7: #{tpu_custom_call.1} parent=1 // loop_footer_branch
      %14 = sbr.rel target = $region3
    $region8: #{tpu_custom_call.1} parent=1 // loop_exit
      _
    %329 = vsyncpa [#allocation3], 1
    %s330 = scalar_lea.sflag [#allocation3], 1
    %331 = vsyncpa %s330, 1
    %332 = vsyncpa [#allocation4], 1
    %s333 = scalar_lea.sflag [#allocation4], 1
    %334 = vsyncpa %s333, 1

</llo_original>
